<compile_context>
chip_gen: v7x
topology: tpu7x:2x2x1
jax: 0.10.0
libtpu: 0.0.40
codegen_flags: <defaults>
</compile_context>

<pallas_src>
import math

import jax
import jax.numpy as jnp
from jax.experimental import pallas as pl
from jax.experimental.pallas import tpu as pltpu


def _kernel(s_ref, dec_ref, x_ref, wt_ref, b_ref, o_ref):
    # s_ref  : (TB, 1, IN)     f32  -- per-batch modulation vectors
    # dec_ref: (TB, 1, OUT_P)  f32  -- per-batch demodulation coefs (hoisted)
    # x_ref  : (TB, TN, IN)    f32
    # wt_ref : (IN, OUT_P)     bf16 -- weight, pre-transposed (grid-invariant)
    # b_ref  : (1, OUT_P)      f32  -- bias (grid-invariant)
    # o_ref  : (TB, TN, OUT_P) f32
    TB, TN, IN = x_ref.shape
    OUT_P = o_ref.shape[-1]

    # Modulate input in f32 on the VPU, cast to bf16 for the MXU.
    xm = (x_ref[...] * s_ref[...]).astype(jnp.bfloat16)           # (TB, TN, IN)

    # Main linear: flatten (TB, TN) so the MXU sees one big-M 2-D matmul.
    y = jnp.dot(xm.reshape(TB * TN, IN), wt_ref[...],
                preferred_element_type=jnp.float32)                # (TB*TN, OUT_P)
    y = y.reshape(TB, TN, OUT_P) + b_ref[...]

    o_ref[...] = y * dec_ref[...]
    # activation=None in this instantiation, so no activation is applied.


def _vmem_capacity_bytes():
    try:
        return int(pltpu.get_tpu_info().vmem_capacity_bytes)
    except Exception:
        return 64 << 20  # conservative default (v7x per-TensorCore VMEM)


def modulated_linear(x, s, weight, bias, ws, bs, *, s_gain, max_rows_cap=2048):
    """x: (B, N, IN) f32, s: (B, S_DIM) f32. Returns (B, N, OUT) f32."""
    B, N, IN = x.shape
    OUT = weight.shape[0]

    # ---- hoisted (tiny / parameter-side) XLA preprocessing ----
    s_mapped = (s @ (ws * s_gain).T + bs).astype(jnp.float32)            # (B, IN)
    # Demod identity: sum_i (W_oi * s_i)^2 == (s*s) @ (W*W)^T  (exact, f32).
    dec = jax.lax.rsqrt((s_mapped * s_mapped) @ (weight * weight).T
                        + 1e-8).astype(jnp.float32)                      # (B, OUT)

    # ---- lane padding of OUT only when it is cheap ----
    OUT_P = OUT
    if OUT % 128 != 0 and OUT >= 128:
        cand = pl.cdiv(OUT, 128) * 128
        if (cand - OUT) * 4 <= cand:        # pad <= 25% of padded width
            OUT_P = cand

    wt = weight.T.astype(jnp.bfloat16)                                    # (IN, OUT)
    b2 = bias.reshape(1, OUT).astype(jnp.float32)
    if OUT_P != OUT:
        pad = OUT_P - OUT
        wt = jnp.pad(wt, ((0, 0), (0, pad)))
        b2 = jnp.pad(b2, ((0, 0), (0, pad)))
        dec = jnp.pad(dec, ((0, 0), (0, pad)))

    # ---- per-generation row budget derived from VMEM capacity ----
    vmem_cap = _vmem_capacity_bytes()
    budget = int(vmem_cap * 0.75)
    w_bytes = IN * OUT_P * 2 + OUT_P * 4            # bf16 weight + f32 bias
    per_row = (2 * IN + 2 * OUT_P) * 4              # x + out blocks, double-buffered
    max_rows = max(8, min((budget - 2 * w_bytes) // per_row, max_rows_cap))

    # ---- choose (tb, tn); never collapse to a single grid step when B >= 2 ----
    tn = N
    if N > max_rows and N % 8 == 0:
        cand = max(8, (max_rows // 8) * 8)
        while cand >= 8 and N % cand != 0:          # pick a divisor -> no N padding
            cand -= 8
        if cand >= 8:
            tn = cand
    grid_n = N // tn

    tb = min(B, max(1, max_rows // tn))
    if grid_n * pl.cdiv(B, tb) < 2 and B >= 2:
        tb = (B + 1) // 2                           # >= 2 "parallel" batch steps
    grid_b = pl.cdiv(B, tb)
    b_pad = grid_b * tb
    if b_pad != B:
        x = jnp.pad(x, ((0, b_pad - B), (0, 0), (0, 0)))
        s_mapped = jnp.pad(s_mapped, ((0, b_pad - B), (0, 0)))
        dec = jnp.pad(dec, ((0, b_pad - B), (0, 0)))

    s3 = s_mapped.reshape(b_pad, 1, IN)
    dec3 = dec.reshape(b_pad, 1, OUT_P)

    def _vmem_usage(single_buffer_invariants):
        nw = 1 if single_buffer_invariants else 2
        return (2 * (tb * tn * IN * 4 + tb * tn * OUT_P * 4
                     + tb * IN * 4 + tb * OUT_P * 4)
                + nw * w_bytes)

    def _run(single_buffer_invariants):
        inv_kwargs = (dict(pipeline_mode=pl.Buffered(1))
                      if single_buffer_invariants else {})
        usage = _vmem_usage(single_buffer_invariants)
        vmem_limit = min(max(2 * usage + (8 << 20), 32 << 20),
                         int(0.9 * vmem_cap), 128 << 20)
        vmem_limit = int(max(vmem_limit, usage + (4 << 20)))
        return pl.pallas_call(
            _kernel,
            out_shape=jax.ShapeDtypeStruct((b_pad, N, OUT_P), jnp.float32),
            grid_spec=pltpu.PrefetchScalarGridSpec(
                num_scalar_prefetch=0,
                grid=(grid_b, grid_n),
                in_specs=[
                    pl.BlockSpec((tb, 1, IN), lambda b, n: (b, 0, 0)),       # s_mapped
                    pl.BlockSpec((tb, 1, OUT_P), lambda b, n: (b, 0, 0)),    # dec
                    pl.BlockSpec((tb, tn, IN), lambda b, n: (b, n, 0)),      # x
                    pl.BlockSpec((IN, OUT_P), lambda b, n: (0, 0),
                                 **inv_kwargs),                              # weight^T
                    pl.BlockSpec((1, OUT_P), lambda b, n: (0, 0),
                                 **inv_kwargs),                              # bias
                ],
                out_specs=pl.BlockSpec((tb, tn, OUT_P), lambda b, n: (b, n, 0)),
            ),
            compiler_params=pltpu.CompilerParams(
                dimension_semantics=("parallel", "parallel"),
                vmem_limit_bytes=vmem_limit,
            ),
        )(s3, dec3, x, wt, b2)

    try:
        out = _run(True)
    except Exception:
        # pipeline_mode=pl.Buffered(1) unsupported on this jax build: fall back
        # to default double-buffered grid-invariant weight blocks.
        out = _run(False)

    if b_pad == B and OUT_P == OUT:
        return out                                   # no post-slice copy needed
    return out[:B, :, :OUT]


def reference(x, s, weight, bias, ws, bs, *, s_gain):
    """Pure-JAX f32 reference mirroring the PyTorch forward."""
    s_mapped = s @ (ws * s_gain).T + bs                      # (B, IN)
    w = weight[None, :, :] * s_mapped[:, None, :]            # (B, OUT, IN)
    decoefs = jax.lax.rsqrt(jnp.sum(w * w, axis=2) + 1e-8)   # (B, OUT)
    xm = x * s_mapped[:, None, :]                            # (B, N, IN)
    y = jnp.einsum("bni,oi->bno", xm, weight) + bias         # (B, N, OUT)
    return y * decoefs[:, None, :]


if __name__ == "__main__":
    B, N, IN, OUT, S_DIM = 2, 8, 32, 32, 16

    key = jax.random.PRNGKey(0)
    k1, k2, k3, k4 = jax.random.split(key, 4)

    # Main weight: xavier_normal_ (std = sqrt(2 / (fan_in + fan_out)))
    xav_std = math.sqrt(2.0 / (IN + OUT))
    weight = jax.random.normal(k1, (OUT, IN), jnp.float32) * xav_std
    bias = jnp.zeros((OUT,), jnp.float32)

    # s_mapping = FullyConnectedLayer(s_dim, in_ch, bias_init=1):
    #   raw weight ~ randn(IN, S_DIM), applied with gain = 1/sqrt(S_DIM), bias = 1
    ws = jax.random.normal(k2, (IN, S_DIM), jnp.float32)
    bs = jnp.ones((IN,), jnp.float32)
    s_gain = 1.0 / math.sqrt(S_DIM)

    x = jax.random.normal(k3, (B, N, IN), jnp.float32)
    s = jax.random.normal(k4, (B, S_DIM), jnp.float32)

    out = modulated_linear(x, s, weight, bias, ws, bs, s_gain=s_gain)
    out = jax.block_until_ready(out)

    ref = reference(x, s, weight, bias, ws, bs, s_gain=s_gain)
    assert out.shape == (B, N, OUT)
    # Tolerance accounts for the bf16 cast of the main-matmul operands
    # (accumulation is f32; modulation and demodulation stay f32).
    assert jnp.allclose(out, ref, atol=5e-2, rtol=5e-2), "mismatch vs reference"

    print("KERNEL_OK")
</pallas_src>

<mosaic_0001>
module attributes {stable_mosaic.version = 11 : i64} {
  func.func @_kernel(%arg0: i32, %arg1: i32, %arg2: memref<1x1x32xf32, #tpu.memory_space<vmem>>, %arg3: memref<1x1x32xf32, #tpu.memory_space<vmem>>, %arg4: memref<1x8x32xf32, #tpu.memory_space<vmem>>, %arg5: memref<32x32xbf16, #tpu.memory_space<vmem>>, %arg6: memref<1x32xf32, #tpu.memory_space<vmem>>, %arg7: memref<1x8x32xf32, #tpu.memory_space<vmem>>) attributes {dimension_semantics = [#tpu.dimension_semantics<parallel>, #tpu.dimension_semantics<parallel>], iteration_bounds = array<i64: 2, 1>, scalar_prefetch = 0 : i64, scratch_operands = 0 : i64, tpu.core_type = #tpu.core_type<tc>, window_params = [{transform_indices = @transform_0, window_bounds = array<i64: 1, 1, 32>}, {transform_indices = @transform_1, window_bounds = array<i64: 1, 1, 32>}, {transform_indices = @transform_2, window_bounds = array<i64: 1, 8, 32>}, {pipeline_mode = #tpu.pipeline_mode<synchronous>, transform_indices = @transform_3, window_bounds = array<i64: 32, 32>}, {pipeline_mode = #tpu.pipeline_mode<synchronous>, transform_indices = @transform_4, window_bounds = array<i64: 1, 32>}, {transform_indices = @transform_5, window_bounds = array<i64: 1, 8, 32>}]} {
    %c0 = arith.constant 0 : index
    %c0_0 = arith.constant 0 : index
    %c0_1 = arith.constant 0 : index
    %0 = vector.load %arg4[%c0, %c0_0, %c0_1] : memref<1x8x32xf32, #tpu.memory_space<vmem>>, vector<1x8x32xf32>
    %c0_2 = arith.constant 0 : index
    %c0_3 = arith.constant 0 : index
    %c0_4 = arith.constant 0 : index
    %1 = vector.load %arg2[%c0_2, %c0_3, %c0_4] : memref<1x1x32xf32, #tpu.memory_space<vmem>>, vector<1x1x32xf32>
    %2 = vector.broadcast %1 : vector<1x1x32xf32> to vector<1x8x32xf32>
    %3 = arith.mulf %0, %2 : vector<1x8x32xf32>
    %4 = arith.truncf %3 : vector<1x8x32xf32> to vector<1x8x32xbf16>
    %5 = vector.shape_cast %4 : vector<1x8x32xbf16> to vector<8x32xbf16>
    %c0_5 = arith.constant 0 : index
    %c0_6 = arith.constant 0 : index
    %6 = vector.load %arg5[%c0_5, %c0_6] : memref<32x32xbf16, #tpu.memory_space<vmem>>, vector<32x32xbf16>
    %cst = arith.constant dense<0.000000e+00> : vector<8x32xf32>
    %7 = tpu.matmul %5, %6, %cst {dimension_numbers = #tpu.dot_dimension_numbers<[1], [0], [0], [1], [0, 0, 1, 1], [], []>} : vector<8x32xbf16>, vector<32x32xbf16>, vector<8x32xf32> -> vector<8x32xf32>
    %8 = vector.shape_cast %7 : vector<8x32xf32> to vector<1x8x32xf32>
    %c0_7 = arith.constant 0 : index
    %c0_8 = arith.constant 0 : index
    %9 = vector.load %arg6[%c0_7, %c0_8] : memref<1x32xf32, #tpu.memory_space<vmem>>, vector<1x32xf32>
    %10 = vector.shape_cast %9 : vector<1x32xf32> to vector<1x1x32xf32>
    %11 = vector.broadcast %10 : vector<1x1x32xf32> to vector<1x8x32xf32>
    %12 = arith.addf %8, %11 : vector<1x8x32xf32>
    %c0_9 = arith.constant 0 : index
    %c0_10 = arith.constant 0 : index
    %c0_11 = arith.constant 0 : index
    %13 = vector.load %arg3[%c0_9, %c0_10, %c0_11] : memref<1x1x32xf32, #tpu.memory_space<vmem>>, vector<1x1x32xf32>
    %14 = vector.broadcast %13 : vector<1x1x32xf32> to vector<1x8x32xf32>
    %15 = arith.mulf %12, %14 : vector<1x8x32xf32>
    %c0_12 = arith.constant 0 : index
    %c0_13 = arith.constant 0 : index
    %c0_14 = arith.constant 0 : index
    %16 = vector.load %arg7[%c0_12, %c0_13, %c0_14] : memref<1x8x32xf32, #tpu.memory_space<vmem>>, vector<1x8x32xf32>
    tpu.vector_store %arg7[%c0_12, %c0_13, %c0_14], %15 {strides = array<i32>} : memref<1x8x32xf32, #tpu.memory_space<vmem>>, vector<1x8x32xf32>,
    return
  }
  func.func @transform_0(%arg0: i32, %arg1: i32) -> (i32, i32, i32) {
    %c0_i32 = arith.constant 0 : i32
    %c0_i32_0 = arith.constant 0 : i32
    %c0_i32_1 = arith.constant 0 : i32
    return %arg0, %c0_i32, %c0_i32_0 : i32, i32, i32
  }
  func.func @transform_1(%arg0: i32, %arg1: i32) -> (i32, i32, i32) {
    %c0_i32 = arith.constant 0 : i32
    %c0_i32_0 = arith.constant 0 : i32
    %c0_i32_1 = arith.constant 0 : i32
    return %arg0, %c0_i32, %c0_i32_0 : i32, i32, i32
  }
  func.func @transform_2(%arg0: i32, %arg1: i32) -> (i32, i32, i32) {
    %c0_i32 = arith.constant 0 : i32
    %c0_i32_0 = arith.constant 0 : i32
    return %arg0, %arg1, %c0_i32 : i32, i32, i32
  }
  func.func @transform_3(%arg0: i32, %arg1: i32) -> (i32, i32) {
    %c0_i32 = arith.constant 0 : i32
    %c0_i32_0 = arith.constant 0 : i32
    %c0_i32_1 = arith.constant 0 : i32
    return %c0_i32, %c0_i32_0 : i32, i32
  }
  func.func @transform_4(%arg0: i32, %arg1: i32) -> (i32, i32) {
    %c0_i32 = arith.constant 0 : i32
    %c0_i32_0 = arith.constant 0 : i32
    %c0_i32_1 = arith.constant 0 : i32
    return %c0_i32, %c0_i32_0 : i32, i32
  }
  func.func @transform_5(%arg0: i32, %arg1: i32) -> (i32, i32, i32) {
    %c0_i32 = arith.constant 0 : i32
    %c0_i32_0 = arith.constant 0 : i32
    return %arg0, %arg1, %c0_i32 : i32, i32, i32
  }
}

module attributes {stable_mosaic.version = 11 : i64} {
  func.func @_kernel(%arg0: i32, %arg1: i32, %arg2: memref<1x1x32xf32, #tpu.memory_space<vmem>>, %arg3: memref<1x1x32xf32, #tpu.memory_space<vmem>>, %arg4: memref<1x8x32xf32, #tpu.memory_space<vmem>>, %arg5: memref<32x32xbf16, #tpu.memory_space<vmem>>, %arg6: memref<1x32xf32, #tpu.memory_space<vmem>>, %arg7: memref<1x8x32xf32, #tpu.memory_space<vmem>>) attributes {dimension_semantics = [#tpu.dimension_semantics<parallel>, #tpu.dimension_semantics<parallel>], iteration_bounds = array<i64: 2, 1>, scalar_prefetch = 0 : i64, scratch_operands = 0 : i64, tpu.core_type = #tpu.core_type<tc>, window_params = [{transform_indices = @transform_0, window_bounds = array<i64: 1, 1, 32>}, {transform_indices = @transform_1, window_bounds = array<i64: 1, 1, 32>}, {transform_indices = @transform_2, window_bounds = array<i64: 1, 8, 32>}, {pipeline_mode = #tpu.pipeline_mode<synchronous>, transform_indices = @transform_3, window_bounds = array<i64: 32, 32>}, {pipeline_mode = #tpu.pipeline_mode<synchronous>, transform_indices = @transform_4, window_bounds = array<i64: 1, 32>}, {transform_indices = @transform_5, window_bounds = array<i64: 1, 8, 32>}]} {
    %c0 = arith.constant 0 : index
    %c0_0 = arith.constant 0 : index
    %c0_1 = arith.constant 0 : index
    %0 = vector.load %arg4[%c0, %c0_0, %c0_1] : memref<1x8x32xf32, #tpu.memory_space<vmem>>, vector<1x8x32xf32>
    %c0_2 = arith.constant 0 : index
    %c0_3 = arith.constant 0 : index
    %c0_4 = arith.constant 0 : index
    %1 = vector.load %arg2[%c0_2, %c0_3, %c0_4] : memref<1x1x32xf32, #tpu.memory_space<vmem>>, vector<1x1x32xf32>
    %2 = vector.broadcast %1 : vector<1x1x32xf32> to vector<1x8x32xf32>
    %3 = arith.mulf %0, %2 : vector<1x8x32xf32>
    %4 = arith.truncf %3 : vector<1x8x32xf32> to vector<1x8x32xbf16>
    %5 = vector.shape_cast %4 : vector<1x8x32xbf16> to vector<8x32xbf16>
    %c0_5 = arith.constant 0 : index
    %c0_6 = arith.constant 0 : index
    %6 = vector.load %arg5[%c0_5, %c0_6] : memref<32x32xbf16, #tpu.memory_space<vmem>>, vector<32x32xbf16>
    %cst = arith.constant dense<0.000000e+00> : vector<8x32xf32>
    %7 = tpu.matmul %5, %6, %cst {dimension_numbers = #tpu.dot_dimension_numbers<[1], [0], [0], [1], [0, 0, 1, 1], [], []>} : vector<8x32xbf16>, vector<32x32xbf16>, vector<8x32xf32> -> vector<8x32xf32>
    %8 = vector.shape_cast %7 : vector<8x32xf32> to vector<1x8x32xf32>
    %c0_7 = arith.constant 0 : index
    %c0_8 = arith.constant 0 : index
    %9 = vector.load %arg6[%c0_7, %c0_8] : memref<1x32xf32, #tpu.memory_space<vmem>>, vector<1x32xf32>
    %10 = vector.shape_cast %9 : vector<1x32xf32> to vector<1x1x32xf32>
    %11 = vector.broadcast %10 : vector<1x1x32xf32> to vector<1x8x32xf32>
    %12 = arith.addf %8, %11 : vector<1x8x32xf32>
    %c0_9 = arith.constant 0 : index
    %c0_10 = arith.constant 0 : index
    %c0_11 = arith.constant 0 : index
    %13 = vector.load %arg3[%c0_9, %c0_10, %c0_11] : memref<1x1x32xf32, #tpu.memory_space<vmem>>, vector<1x1x32xf32>
    %14 = vector.broadcast %13 : vector<1x1x32xf32> to vector<1x8x32xf32>
    %15 = arith.mulf %12, %14 : vector<1x8x32xf32>
    %c0_12 = arith.constant 0 : index
    %c0_13 = arith.constant 0 : index
    %c0_14 = arith.constant 0 : index
    %16 = vector.load %arg7[%c0_12, %c0_13, %c0_14] : memref<1x8x32xf32, #tpu.memory_space<vmem>>, vector<1x8x32xf32>
    tpu.vector_store %arg7[%c0_12, %c0_13, %c0_14], %15 {strides = array<i32>} : memref<1x8x32xf32, #tpu.memory_space<vmem>>, vector<1x8x32xf32>,
    return
  }
  func.func @transform_0(%arg0: i32, %arg1: i32) -> (i32, i32, i32) {
    %c0_i32 = arith.constant 0 : i32
    %c0_i32_0 = arith.constant 0 : i32
    %c0_i32_1 = arith.constant 0 : i32
    return %arg0, %c0_i32, %c0_i32_0 : i32, i32, i32
  }
  func.func @transform_1(%arg0: i32, %arg1: i32) -> (i32, i32, i32) {
    %c0_i32 = arith.constant 0 : i32
    %c0_i32_0 = arith.constant 0 : i32
    %c0_i32_1 = arith.constant 0 : i32
    return %arg0, %c0_i32, %c0_i32_0 : i32, i32, i32
  }
  func.func @transform_2(%arg0: i32, %arg1: i32) -> (i32, i32, i32) {
    %c0_i32 = arith.constant 0 : i32
    %c0_i32_0 = arith.constant 0 : i32
    return %arg0, %arg1, %c0_i32 : i32, i32, i32
  }
  func.func @transform_3(%arg0: i32, %arg1: i32) -> (i32, i32) {
    %c0_i32 = arith.constant 0 : i32
    %c0_i32_0 = arith.constant 0 : i32
    %c0_i32_1 = arith.constant 0 : i32
    return %c0_i32, %c0_i32_0 : i32, i32
  }
  func.func @transform_4(%arg0: i32, %arg1: i32) -> (i32, i32) {
    %c0_i32 = arith.constant 0 : i32
    %c0_i32_0 = arith.constant 0 : i32
    %c0_i32_1 = arith.constant 0 : i32
    return %c0_i32, %c0_i32_0 : i32, i32
  }
  func.func @transform_5(%arg0: i32, %arg1: i32) -> (i32, i32, i32) {
    %c0_i32 = arith.constant 0 : i32
    %c0_i32_0 = arith.constant 0 : i32
    return %arg0, %arg1, %c0_i32 : i32, i32, i32
  }
}

</mosaic_0001>

<llo_original>
// kernel: tpu_custom_call.1
$region0: #{tpu_custom_call.1}
  #allocation0 [shape = 'u32[]', space=smem, size = 0x4, offset = 0x4, fixed_abs, tag = 'smem constant byte address 0x4 - core index']
  #allocation1 [shape = 'u32[144,128]{1,0:T(1,128)}', space=vmem, size = 0x12000, scoped, tag = 'internal scratch']
  %s0 = inlined_call_operand.hbm [shape: f32[2,1,32], index: 0, kind: input, shape index: {}]
  %s1 = inlined_call_operand.vmem [shape: f32[2,1,32], index: 1, kind: input, shape index: {}]
  %s2 = inlined_call_operand.hbm [shape: f32[2,8,32], index: 2, kind: input, shape index: {}]
  %s3 = inlined_call_operand.hbm [shape: bf16[32,32], index: 3, kind: input, shape index: {}]
  %s4 = inlined_call_operand.vmem [shape: f32[1,32], index: 4, kind: input, shape index: {}]
  %s5 = inlined_call_operand.hbm [shape: f32[2,8,32], index: 5, kind: output, shape index: {}]
  %s6 = sld [smem:[#allocation0]]
  $region65: #{tpu_custom_call.1} parent=0
    _
  %s8 = ssub.s32 1, %s6
  %s9 = scalar_select 0, %s8, %s6
  $region1: #{tpu_custom_call.1} parent=0
    #allocation2 [shape = 'u8[1024]{0}', space=vmem, size = 0x400, scoped, tag = 'input window, operand 0']
    #allocation3 [shape = 's32[2]{0}', space=sflag, size = 0x8, scoped, tag = 'scoped memory for tpu_custom_call.1']
    #allocation4 [shape = 's32[2]{0}', space=sflag, size = 0x8, scoped, tag = 'scoped memory for tpu_custom_call.1']
    #allocation5 [shape = 'u8[8192]{0}', space=vmem, size = 0x2000, scoped, tag = 'input window, operand 2']
    #allocation6 [shape = 's32[2]{0}', space=sflag, size = 0x8, scoped, tag = 'scoped memory for tpu_custom_call.1']
    #allocation7 [shape = 'u8[8192]{0}', space=vmem, size = 0x2000, scoped, tag = 'input window, operand 3, single buffered']
    #allocation8 [shape = 'u8[8192]{0}', space=vmem, size = 0x2000, scoped, tag = 'output window, operand 0']
    %10 = vsyncpa [#allocation3], 0
    %s11 = scalar_lea.sflag [#allocation3], 1
    %12 = vsyncpa %s11, 0
    %13 = vsyncpa [#allocation6], 0
    %s14 = scalar_lea.sflag [#allocation6], 1
    %15 = vsyncpa %s14, 0
    %16 = vsyncpa [#allocation4], 0
    %s17 = scalar_lea.sflag [#allocation4], 1
    %18 = vsyncpa %s17, 0
    loop: start=0, step=1, limit=4
    $region2: #{tpu_custom_call.1} parent=1 // loop_pre_header
      _
    $region3: #{tpu_custom_call.1} parent=1 // loop_header
      %s20 = sphi 0, %s24
      %p21 = scmp.ge.s32.totalorder %s20, 4
      %s27 = sphi 0, %s39
      %s28 = sphi 0, %s35
      %s29 = sphi 0, %s27
      %s30 = sphi 0, %s28
      %s31 = sphi 0, %s29
      %s32 = sphi 0, %s30
      %s42 = sphi 0, %s44
      %s45 = sphi 0, %s42
      %s46 = sphi 0, %s45
      %s62 = sphi 0, %s46
      %s68 = sphi 0, %s70
      %s71 = sphi 0, %s68
      %s72 = sphi 0, %s71
      %s88 = sphi 0, %s72
      %s96 = sphi 0, %s98
      %s99 = sphi 0, %s96
      %s100 = sphi 0, %s99
      %s116 = sphi 0, %s100
      %s120 = sphi 0, %s120
      %s122 = sphi 0, %s120
      %s123 = sphi 0, %s122
      %s137 = sphi 0, %s123
      %s141 = sphi 0, %s141
      %s143 = sphi 0, %s141
      %s144 = sphi 0, %s143
      %s158 = sphi 0, %s144
      %s166 = sphi 0, %s168
      %s169 = sphi 0, %s166
      %s170 = sphi 0, %s169
      %s186 = sphi 0, %s170
    $region4: #{tpu_custom_call.1} parent=1 // loop_header_branch
      %23 = sbr.rel (%p21) target = $region8
    $region5: #{tpu_custom_call.1} parent=1 // loop_body
      %s25 = ssub.s32 %s20, 1
      %s26 = ssub.s32 %s20, 2
      %s33 = sadd.s32 1, %s28
      %p34 = scmp.ge.s32.totalorder %s33, 1
      %s35 = scalar_select %p34, 0, %s33
      %s36 = sadd.s32 1, %s27
      %s37 = scalar_select %p34, %s36, %s27
      %p38 = scmp.ge.s32.totalorder %s37, 2
      %s39 = scalar_select %p38, 0, %s37
      %s40 = ssub.s32 %s27, %s39
      %p41 = scmp.eq.s32.totalorder %s40, 0
      %s43 = sadd.s32 %s42, 1
      %s44 = scalar_select %p41, %s42, %s43
      %p47 = pneg %p41
      %p48 = scmp.eq.s32.totalorder %s20, 1
      %p49 = por %p47, %p48
      %p50 = scmp.ne.s32.totalorder %s42, %s45
      %p51 = scmp.eq.s32.totalorder %s20, 0
      %p52 = por %p50, %p51
      %p53 = scmp.ne.s32.totalorder %s42, %s45
      %p54 = scmp.eq.s32.totalorder %s25, 1
      %p55 = por %p53, %p54
      %p56 = scmp.ne.s32.totalorder %s45, %s46
      %p57 = scmp.eq.s32.totalorder %s25, 0
      %p58 = por %p56, %p57
      %p59 = scmp.ne.s32.totalorder %s45, %s46
      %p60 = scmp.eq.s32.totalorder %s26, 1
      %p61 = por %p59, %p60
      %p63 = scmp.ne.s32.totalorder %s46, %s62
      %p64 = scmp.eq.s32.totalorder %s26, 0
      %p65 = por %p63, %p64
      %s66 = ssub.s32 %s27, %s39
      %p67 = scmp.eq.s32.totalorder %s66, 0
      %s69 = sadd.s32 %s68, 1
      %s70 = scalar_select %p67, %s68, %s69
      %p73 = pneg %p67
      %p74 = scmp.eq.s32.totalorder %s20, 1
      %p75 = por %p73, %p74
      %p76 = scmp.ne.s32.totalorder %s68, %s71
      %p77 = scmp.eq.s32.totalorder %s20, 0
      %p78 = por %p76, %p77
      %p79 = scmp.ne.s32.totalorder %s68, %s71
      %p80 = scmp.eq.s32.totalorder %s25, 1
      %p81 = por %p79, %p80
      %p82 = scmp.ne.s32.totalorder %s71, %s72
      %p83 = scmp.eq.s32.totalorder %s25, 0
      %p84 = por %p82, %p83
      %p85 = scmp.ne.s32.totalorder %s71, %s72
      %p86 = scmp.eq.s32.totalorder %s26, 1
      %p87 = por %p85, %p86
      %p89 = scmp.ne.s32.totalorder %s72, %s88
      %p90 = scmp.eq.s32.totalorder %s26, 0
      %p91 = por %p89, %p90
      %s92 = ssub.s32 %s27, %s39
      %s93 = ssub.s32 %s28, %s35
      %s94 = sor.u32 %s92, %s93
      %p95 = scmp.eq.s32.totalorder %s94, 0
      %s97 = sadd.s32 %s96, 1
      %s98 = scalar_select %p95, %s96, %s97
      %p101 = pneg %p95
      %p102 = scmp.eq.s32.totalorder %s20, 1
      %p103 = por %p101, %p102
      %p104 = scmp.ne.s32.totalorder %s96, %s99
      %p105 = scmp.eq.s32.totalorder %s20, 0
      %p106 = por %p104, %p105
      %p107 = scmp.ne.s32.totalorder %s96, %s99
      %p108 = scmp.eq.s32.totalorder %s25, 1
      %p109 = por %p107, %p108
      %p110 = scmp.ne.s32.totalorder %s99, %s100
      %p111 = scmp.eq.s32.totalorder %s25, 0
      %p112 = por %p110, %p111
      %p113 = scmp.ne.s32.totalorder %s99, %s100
      %p114 = scmp.eq.s32.totalorder %s26, 1
      %p115 = por %p113, %p114
      %p117 = scmp.ne.s32.totalorder %s100, %s116
      %p118 = scmp.eq.s32.totalorder %s26, 0
      %p119 = por %p117, %p118
      %s121 = sadd.s32 %s120, 1
      %p124 = scmp.eq.s32.totalorder %s20, 1
      %p125 = scmp.ne.s32.totalorder %s120, %s122
      %p126 = scmp.eq.s32.totalorder %s20, 0
      %p127 = por %p125, %p126
      %p128 = scmp.ne.s32.totalorder %s120, %s122
      %p129 = scmp.eq.s32.totalorder %s25, 1
      %p130 = por %p128, %p129
      %p131 = scmp.ne.s32.totalorder %s122, %s123
      %p132 = scmp.eq.s32.totalorder %s25, 0
      %p133 = por %p131, %p132
      %p134 = scmp.ne.s32.totalorder %s122, %s123
      %p135 = scmp.eq.s32.totalorder %s26, 1
      %p136 = por %p134, %p135
      %p138 = scmp.ne.s32.totalorder %s123, %s137
      %p139 = scmp.eq.s32.totalorder %s26, 0
      %p140 = por %p138, %p139
      %s142 = sadd.s32 %s141, 1
      %p145 = scmp.eq.s32.totalorder %s20, 1
      %p146 = scmp.ne.s32.totalorder %s141, %s143
      %p147 = scmp.eq.s32.totalorder %s20, 0
      %p148 = por %p146, %p147
      %p149 = scmp.ne.s32.totalorder %s141, %s143
      %p150 = scmp.eq.s32.totalorder %s25, 1
      %p151 = por %p149, %p150
      %p152 = scmp.ne.s32.totalorder %s143, %s144
      %p153 = scmp.eq.s32.totalorder %s25, 0
      %p154 = por %p152, %p153
      %p155 = scmp.ne.s32.totalorder %s143, %s144
      %p156 = scmp.eq.s32.totalorder %s26, 1
      %p157 = por %p155, %p156
      %p159 = scmp.ne.s32.totalorder %s144, %s158
      %p160 = scmp.eq.s32.totalorder %s26, 0
      %p161 = por %p159, %p160
      %s162 = ssub.s32 %s27, %s39
      %s163 = ssub.s32 %s28, %s35
      %s164 = sor.u32 %s162, %s163
      %p165 = scmp.eq.s32.totalorder %s164, 0
      %s167 = sadd.s32 %s166, 1
      %s168 = scalar_select %p165, %s166, %s167
      %p171 = pneg %p165
      %p172 = scmp.eq.s32.totalorder %s20, 1
      %p173 = por %p171, %p172
      %p174 = scmp.ne.s32.totalorder %s166, %s169
      %p175 = scmp.eq.s32.totalorder %s20, 0
      %p176 = por %p174, %p175
      %p177 = scmp.ne.s32.totalorder %s166, %s169
      %p178 = scmp.eq.s32.totalorder %s25, 1
      %p179 = por %p177, %p178
      %p180 = scmp.ne.s32.totalorder %s169, %s170
      %p181 = scmp.eq.s32.totalorder %s25, 0
      %p182 = por %p180, %p181
      %p183 = scmp.ne.s32.totalorder %s169, %s170
      %p184 = scmp.eq.s32.totalorder %s26, 1
      %p185 = por %p183, %p184
      %p187 = scmp.ne.s32.totalorder %s170, %s186
      %p188 = scmp.eq.s32.totalorder %s26, 0
      %p189 = por %p187, %p188
      %p190 = scmp.le.s32.totalorder 1, %s20
      %p191 = scmp.lt.s32.totalorder %s20, 3
      %p192 = pnand %p190, %p191
      %p193 = pneg %p192
      // Predicated region
      $region9: #{tpu_custom_call.1} parent=5 // pred_check
        _
      $region10: #{tpu_custom_call.1} parent=5 // pred_check_branch
        %195 = sbr.rel (%p192) target = $region12
      $region11: #{tpu_custom_call.1} parent=5 // pred_region
        %s196 = ssub.s32 %s20, 1
        // Predicated region
        $region13: #{tpu_custom_call.1} parent=11 // pred_check
          %p197 = pneg %p133
        $region14: #{tpu_custom_call.1} parent=11 // pred_check_branch
          %199 = sbr.rel (%p197) target = $region16
        $region15: #{tpu_custom_call.1} parent=11 // pred_region
          %s201 = ssub.s32 256, 256
          %202 = vsyncadd [#allocation6], %s201
          %s203 = sshll.u32 [#allocation7], 4
          %s204 = int_to_ptr.vmem [resolvable:$true] %s203
          %209 = dma.hbm_to_vmem [thread:$0]  %s3, 256, %s204, [#allocation6], 64, 64, 4
        $region16: #{tpu_custom_call.1} parent=11 // pred_fallthru
          _
        // Predicated region
        $region17: #{tpu_custom_call.1} parent=11 // pred_check
          %p210 = pneg %p154
        $region18: #{tpu_custom_call.1} parent=11 // pred_check_branch
          %212 = sbr.rel (%p210) target = $region20
        $region19: #{tpu_custom_call.1} parent=11 // pred_region
          _
        $region20: #{tpu_custom_call.1} parent=11 // pred_fallthru
          _
      $region12: #{tpu_custom_call.1} parent=5 // pred_fallthru
        _
      %p213 = scmp.lt.s32.totalorder %s20, 2
      // Predicated region
      $region21: #{tpu_custom_call.1} parent=5 // pred_check
        %p214 = pneg %p213
      $region22: #{tpu_custom_call.1} parent=5 // pred_check_branch
        %216 = sbr.rel (%p214) target = $region24
      $region23: #{tpu_custom_call.1} parent=5 // pred_region
        // Predicated region
        $region25: #{tpu_custom_call.1} parent=23 // pred_check
          %p217 = pneg %p52
        $region26: #{tpu_custom_call.1} parent=23 // pred_check_branch
          %219 = sbr.rel (%p217) target = $region28
        $region27: #{tpu_custom_call.1} parent=23 // pred_region
          %s220 = sand.u32 %s42, 1
          %s221 = scalar_lea.sflag [#allocation3], %s220
          %s222 = sand.u32 %s42, 1
          %s223 = scalar_lea.vmem [#allocation2], %s222
          %s225 = ssub.s32 16, 16
          %226 = vsyncadd %s221, %s225
          %s227 = smul.addr %s27, 16
          %s228 = scalar_lea.hbm %s0, %s227
          %s230 = sshll.u32 %s223, 4
          %s231 = int_to_ptr.vmem [resolvable:$true] %s230
          %233 = dma.hbm_to_vmem [thread:$0]  %s228, 16, %s231, %s221
        $region28: #{tpu_custom_call.1} parent=23 // pred_fallthru
          _
        // Predicated region
        $region29: #{tpu_custom_call.1} parent=23 // pred_check
          %p234 = pneg %p78
        $region30: #{tpu_custom_call.1} parent=23 // pred_check_branch
          %236 = sbr.rel (%p234) target = $region32
        $region31: #{tpu_custom_call.1} parent=23 // pred_region
          %p237 = scmp.lt.s32.totalorder %s27, 1
          %s238 = scalar_select %p237, %s27, 1
          %s239 = scalar_lea.vmem %s1, %s238
        $region32: #{tpu_custom_call.1} parent=23 // pred_fallthru
          _
        // Predicated region
        $region33: #{tpu_custom_call.1} parent=23 // pred_check
          %p240 = pneg %p106
        $region34: #{tpu_custom_call.1} parent=23 // pred_check_branch
          %242 = sbr.rel (%p240) target = $region36
        $region35: #{tpu_custom_call.1} parent=23 // pred_region
          %s243 = sand.u32 %s20, 1
          %s244 = scalar_lea.sflag [#allocation6], %s243
          %s245 = sand.u32 %s96, 1
          %s246 = smul.addr %s245, 8
          %s247 = scalar_lea.vmem [#allocation5], %s246
          %s249 = ssub.s32 128, 128
          %250 = vsyncadd %s244, %s249
          %s251 = sadd.s32 %s28, %s27
          %s252 = smul.addr %s251, 128
          %s253 = scalar_lea.hbm %s2, %s252
          %s255 = sshll.u32 %s247, 4
          %s256 = int_to_ptr.vmem [resolvable:$true] %s255
          %258 = dma.hbm_to_vmem [thread:$0]  %s253, 128, %s256, %s244
        $region36: #{tpu_custom_call.1} parent=23 // pred_fallthru
          _
      $region24: #{tpu_custom_call.1} parent=5 // pred_fallthru
        _
      %p259 = scmp.le.s32.totalorder 1, %s20
      %p260 = scmp.lt.s32.totalorder %s20, 3
      %p261 = pnand %p259, %p260
      %p262 = pneg %p261
      // Predicated region
      $region37: #{tpu_custom_call.1} parent=5 // pred_check
        _
      $region38: #{tpu_custom_call.1} parent=5 // pred_check_branch
        %264 = sbr.rel (%p261) target = $region40
      $region39: #{tpu_custom_call.1} parent=5 // pred_region
        %s265 = ssub.s32 %s20, 1
        %s266 = sand.u32 %s45, 1
        %s267 = scalar_lea.sflag [#allocation3], %s266
        %s268 = sand.u32 %s45, 1
        %s269 = scalar_lea.vmem [#allocation2], %s268
        // Predicated region
        $region41: #{tpu_custom_call.1} parent=39 // pred_check
          %p270 = pneg %p58
        $region42: #{tpu_custom_call.1} parent=39 // pred_check_branch
          %272 = sbr.rel (%p270) target = $region44
        $region43: #{tpu_custom_call.1} parent=39 // pred_region
          %273 = dma.done %s267, 16
        $region44: #{tpu_custom_call.1} parent=39 // pred_fallthru
          _
        %s274 = sand.u32 %s25, 1
        %s275 = scalar_lea.sflag [#allocation6], %s274
        %s276 = sand.u32 %s99, 1
        %s277 = smul.addr %s276, 8
        %s278 = scalar_lea.vmem [#allocation5], %s277
        // Predicated region
        $region45: #{tpu_custom_call.1} parent=39 // pred_check
          %p279 = pneg %p112
        $region46: #{tpu_custom_call.1} parent=39 // pred_check_branch
          %281 = sbr.rel (%p279) target = $region48
        $region47: #{tpu_custom_call.1} parent=39 // pred_region
          %282 = dma.done %s275, 128
        $region48: #{tpu_custom_call.1} parent=39 // pred_fallthru
          _
        // Predicated region
        $region49: #{tpu_custom_call.1} parent=39 // pred_check
          %p283 = pneg %p133
        $region50: #{tpu_custom_call.1} parent=39 // pred_check_branch
          %285 = sbr.rel (%p283) target = $region52
        $region51: #{tpu_custom_call.1} parent=39 // pred_region
          %286 = dma.done [#allocation6], 256
        $region52: #{tpu_custom_call.1} parent=39 // pred_fallthru
          _
        %s287 = sand.u32 %s45, 1
        %s288 = scalar_lea.sflag [#allocation3], %s287
        %s289 = sand.u32 %s45, 1
        %s290 = scalar_lea.vmem [#allocation2], %s289
        %p291 = pneg %p58
        %p292 = pneg %p55
        %p293 = scmp.lt.s32.totalorder %s29, 1
        %s294 = scalar_select %p293, %s29, 1
        %s295 = scalar_lea.vmem %s1, %s294
        %p296 = pneg %p84
        %p297 = pneg %p81
        %s298 = sand.u32 %s25, 1
        %s299 = scalar_lea.sflag [#allocation6], %s298
        %s300 = sand.u32 %s99, 1
        %s301 = smul.addr %s300, 8
        %s302 = scalar_lea.vmem [#allocation5], %s301
        %p303 = pneg %p112
        %p304 = pneg %p109
        %p305 = pneg %p133
        %p306 = pneg %p130
        %p307 = pneg %p154
        %p308 = pneg %p151
        %p309 = pneg %p182
        %p310 = pneg %p179
        %s311 = sand.u32 %s169, 1
        %s312 = scalar_lea.sflag [#allocation4], %s311
        %s313 = sand.u32 %s169, 1
        %s314 = smul.addr %s313, 8
        %s315 = scalar_lea.vmem [#allocation8], %s314
        %p316 = scmp.lt.s32.totalorder %s29, 1
        %s317 = scalar_select %p316, %s29, 1
        %s318 = scalar_lea.vmem %s1, %s317
        %v320 = vld [vmem:[%s278] sm:$0xff]
        %v321 = vld [vmem:[%s269] sm:$0x1]
        %v323 = vlaneseq
        %v324 = vshrl.u32 %v323, 7
        %v325 = vsub.s32 0, %v324
        %v326 = vrot.slane %v321, %v325
        %v328 = vmul.f32 %v320, %v326
        %v329 = vpack.c.bf16 %v328, %v328
        %v330 = vld [vmem:[#allocation7] sm:$0xf]
        %v331 = vld [vmem:[#allocation7 + $0x4] sm:$0xf]
        %v332 = vld [vmem:[#allocation7 + $0x8] sm:$0xf]
        %v333 = vld [vmem:[#allocation7 + $0xc] sm:$0xf]
        %v338 = vunpack.c.l.b16 %v330
        %v339 = vunpack.c.l.b16 %v331
        %v340 = vunpack.c.l.b16 %v332
        %v341 = vunpack.c.l.b16 %v333
        %v342 = vpack.c.b16 %v339, %v338
        %v343 = vpack.c.b16 %v341, %v340
        %vm346 = vcmask 261120
        %v348 = vsel %vm346, %v329, 0
        %350 = vmatprep.subr.bf16.mxu0 0
        %351 = vmatpush1.bf16.msra.mxu0 %v342
        %352 = vmatprep.subr.bf16.mxu0 0
        %353 = vmatpush1.bf16.msra.mxu0 %v343
        %354 = vmatprep.subr.bf16.mxu0 0
        %355 = vmatpush1.bf16.msra.mxu0 0
        %356 = vmatprep.subr.bf16.mxu0 0
        %357 = vmatpush1.bf16.msra.mxu0 0
        %358 = vmatprep.subr.bf16.mxu0 0
        %359 = vmatpush1.bf16.msra.mxu0 0
        %360 = vmatprep.subr.bf16.mxu0 0
        %361 = vmatpush1.bf16.msra.mxu0 0
        %362 = vmatprep.subr.bf16.mxu0 0
        %363 = vmatpush1.bf16.msra.mxu0 0
        %364 = vmatprep.subr.bf16.mxu0 0
        %365 = vmatpush1.bf16.msra.mxu0 0
        %366 = vmatprep.subr.bf16.mxu0 0
        %367 = vmatpush1.bf16.msra.mxu0 0
        %368 = vmatprep.subr.bf16.mxu0 0
        %369 = vmatpush1.bf16.msra.mxu0 0
        %370 = vmatprep.subr.bf16.mxu0 0
        %371 = vmatpush1.bf16.msra.mxu0 0
        %372 = vmatprep.subr.bf16.mxu0 0
        %373 = vmatpush1.bf16.msra.mxu0 0
        %374 = vmatprep.subr.bf16.mxu0 0
        %375 = vmatpush1.bf16.msra.mxu0 0
        %376 = vmatprep.subr.bf16.mxu0 0
        %377 = vmatpush1.bf16.msra.mxu0 0
        %378 = vmatprep.subr.bf16.mxu0 0
        %379 = vmatpush1.bf16.msra.mxu0 0
        %380 = vmatprep.subr.bf16.mxu0 0
        %381 = vmatpush1.bf16.msra.mxu0 0
        %382 = vmatprep.mubr.bf16.mxu0 0
        %383 = vmatmul.mubr.bf16.gmra.mrb[0].mxu0 %v348
        %v384 = vpop.f32.mrb[0].mxu0
        %v385 = vadd.f32 0.0, %v384
        %v386 = vpop.f32.mrb[0].mxu0
        %v387 = vpop.f32.mrb[0].mxu0
        %v388 = vpop.f32.mrb[0].mxu0
        %389 = vdwg.mxu0
        %v390 = vld [vmem:[%s4] sm:$0x1]
        %v392 = vlaneseq
        %v393 = vshrl.u32 %v392, 7
        %v394 = vsub.s32 0, %v393
        %v395 = vrot.slane %v390, %v394
        %v397 = vadd.f32 %v385, %v395
        %v398 = vld [vmem:[%s318] sm:$0x1]
        %v400 = vlaneseq
        %v401 = vshrl.u32 %v400, 7
        %v402 = vsub.s32 0, %v401
        %v403 = vrot.slane %v398, %v402
        %v405 = vmul.f32 %v397, %v403
        %406 = vst.msk [vmem:[%s315] sm:$0xff] %vm346, %v405
        %s407 = sand.u32 %s169, 1
        %s408 = scalar_lea.sflag [#allocation4], %s407
        %s409 = sand.u32 %s169, 1
        %s410 = smul.addr %s409, 8
        %s411 = scalar_lea.vmem [#allocation8], %s410
        // Predicated region
        $region53: #{tpu_custom_call.1} parent=39 // pred_check
          %p412 = pneg %p179
        $region54: #{tpu_custom_call.1} parent=39 // pred_check_branch
          %414 = sbr.rel (%p412) target = $region56
        $region55: #{tpu_custom_call.1} parent=39 // pred_region
          %s416 = ssub.s32 128, 128
          %417 = vsyncadd %s408, %s416
          %s418 = sadd.s32 %s30, %s29
          %s419 = smul.addr %s418, 128
          %s420 = scalar_lea.hbm %s5, %s419
          %s422 = sshll.u32 %s411, 4
          %s423 = int_to_ptr.vmem [resolvable:$true] %s422
          %425 = dma.vmem_to_hbm [thread:$0]  %s423, 128, %s420, %s408
        $region56: #{tpu_custom_call.1} parent=39 // pred_fallthru
          _
      $region40: #{tpu_custom_call.1} parent=5 // pred_fallthru
        _
      %p426 = scmp.le.s32.totalorder 2, %s20
      // Predicated region
      $region57: #{tpu_custom_call.1} parent=5 // pred_check
        %p427 = pneg %p426
      $region58: #{tpu_custom_call.1} parent=5 // pred_check_branch
        %429 = sbr.rel (%p427) target = $region60
      $region59: #{tpu_custom_call.1} parent=5 // pred_region
        %s430 = ssub.s32 %s20, 2
        // Predicated region
        $region61: #{tpu_custom_call.1} parent=59 // pred_check
          %p431 = pneg %p185
        $region62: #{tpu_custom_call.1} parent=59 // pred_check_branch
          %433 = sbr.rel (%p431) target = $region64
        $region63: #{tpu_custom_call.1} parent=59 // pred_region
          %s434 = sand.u32 %s170, 1
          %s435 = scalar_lea.sflag [#allocation4], %s434
          %s436 = sand.u32 %s170, 1
          %s437 = smul.addr %s436, 8
          %s438 = scalar_lea.vmem [#allocation8], %s437
          %439 = dma.done %s435, 128
        $region64: #{tpu_custom_call.1} parent=59 // pred_fallthru
          _
      $region60: #{tpu_custom_call.1} parent=5 // pred_fallthru
        _
    $region6: #{tpu_custom_call.1} parent=1 // loop_footer
      %s24 = sadd.s32 1, %s20
    $region7: #{tpu_custom_call.1} parent=1 // loop_footer_branch
      %19 = sbr.rel target = $region3
    $region8: #{tpu_custom_call.1} parent=1 // loop_exit
      _
    %440 = vsyncpa [#allocation3], 1
    %s441 = scalar_lea.sflag [#allocation3], 1
    %442 = vsyncpa %s441, 1
    %443 = vsyncpa [#allocation6], 1
    %s444 = scalar_lea.sflag [#allocation6], 1
    %445 = vsyncpa %s444, 1
    %446 = vsyncpa [#allocation4], 1
    %s447 = scalar_lea.sflag [#allocation4], 1
    %448 = vsyncpa %s447, 1

// kernel: tpu_custom_call.1
$region0: #{tpu_custom_call.1}
  #allocation0 [shape = 'u32[]', space=smem, size = 0x4, offset = 0x4, fixed_abs, tag = 'smem constant byte address 0x4 - core index']
  #allocation1 [shape = 'u32[144,128]{1,0:T(1,128)}', space=vmem, size = 0x12000, scoped, tag = 'internal scratch']
  %s0 = inlined_call_operand.hbm [shape: f32[2,1,32], index: 0, kind: input, shape index: {}]
  %s1 = inlined_call_operand.vmem [shape: f32[2,1,32], index: 1, kind: input, shape index: {}]
  %s2 = inlined_call_operand.hbm [shape: f32[2,8,32], index: 2, kind: input, shape index: {}]
  %s3 = inlined_call_operand.hbm [shape: bf16[32,32], index: 3, kind: input, shape index: {}]
  %s4 = inlined_call_operand.vmem [shape: f32[1,32], index: 4, kind: input, shape index: {}]
  %s5 = inlined_call_operand.hbm [shape: f32[2,8,32], index: 5, kind: output, shape index: {}]
  %s6 = sld [smem:[#allocation0]]
  $region65: #{tpu_custom_call.1} parent=0
    _
  %s8 = ssub.s32 1, %s6
  %s9 = scalar_select 0, %s8, %s6
  $region1: #{tpu_custom_call.1} parent=0
    #allocation2 [shape = 'u8[1024]{0}', space=vmem, size = 0x400, scoped, tag = 'input window, operand 0']
    #allocation3 [shape = 's32[2]{0}', space=sflag, size = 0x8, scoped, tag = 'scoped memory for tpu_custom_call.1']
    #allocation4 [shape = 's32[2]{0}', space=sflag, size = 0x8, scoped, tag = 'scoped memory for tpu_custom_call.1']
    #allocation5 [shape = 'u8[8192]{0}', space=vmem, size = 0x2000, scoped, tag = 'input window, operand 2']
    #allocation6 [shape = 's32[2]{0}', space=sflag, size = 0x8, scoped, tag = 'scoped memory for tpu_custom_call.1']
    #allocation7 [shape = 'u8[8192]{0}', space=vmem, size = 0x2000, scoped, tag = 'input window, operand 3, single buffered']
    #allocation8 [shape = 'u8[8192]{0}', space=vmem, size = 0x2000, scoped, tag = 'output window, operand 0']
    %10 = vsyncpa [#allocation3], 0
    %s11 = scalar_lea.sflag [#allocation3], 1
    %12 = vsyncpa %s11, 0
    %13 = vsyncpa [#allocation6], 0
    %s14 = scalar_lea.sflag [#allocation6], 1
    %15 = vsyncpa %s14, 0
    %16 = vsyncpa [#allocation4], 0
    %s17 = scalar_lea.sflag [#allocation4], 1
    %18 = vsyncpa %s17, 0
    loop: start=0, step=1, limit=4
    $region2: #{tpu_custom_call.1} parent=1 // loop_pre_header
      _
    $region3: #{tpu_custom_call.1} parent=1 // loop_header
      %s20 = sphi 0, %s24
      %p21 = scmp.ge.s32.totalorder %s20, 4
      %s27 = sphi 0, %s39
      %s28 = sphi 0, %s35
      %s29 = sphi 0, %s27
      %s30 = sphi 0, %s28
      %s31 = sphi 0, %s29
      %s32 = sphi 0, %s30
      %s42 = sphi 0, %s44
      %s45 = sphi 0, %s42
      %s46 = sphi 0, %s45
      %s62 = sphi 0, %s46
      %s68 = sphi 0, %s70
      %s71 = sphi 0, %s68
      %s72 = sphi 0, %s71
      %s88 = sphi 0, %s72
      %s96 = sphi 0, %s98
      %s99 = sphi 0, %s96
      %s100 = sphi 0, %s99
      %s116 = sphi 0, %s100
      %s120 = sphi 0, %s120
      %s122 = sphi 0, %s120
      %s123 = sphi 0, %s122
      %s137 = sphi 0, %s123
      %s141 = sphi 0, %s141
      %s143 = sphi 0, %s141
      %s144 = sphi 0, %s143
      %s158 = sphi 0, %s144
      %s166 = sphi 0, %s168
      %s169 = sphi 0, %s166
      %s170 = sphi 0, %s169
      %s186 = sphi 0, %s170
    $region4: #{tpu_custom_call.1} parent=1 // loop_header_branch
      %23 = sbr.rel (%p21) target = $region8
    $region5: #{tpu_custom_call.1} parent=1 // loop_body
      %s25 = ssub.s32 %s20, 1
      %s26 = ssub.s32 %s20, 2
      %s33 = sadd.s32 1, %s28
      %p34 = scmp.ge.s32.totalorder %s33, 1
      %s35 = scalar_select %p34, 0, %s33
      %s36 = sadd.s32 1, %s27
      %s37 = scalar_select %p34, %s36, %s27
      %p38 = scmp.ge.s32.totalorder %s37, 2
      %s39 = scalar_select %p38, 0, %s37
      %s40 = ssub.s32 %s27, %s39
      %p41 = scmp.eq.s32.totalorder %s40, 0
      %s43 = sadd.s32 %s42, 1
      %s44 = scalar_select %p41, %s42, %s43
      %p47 = pneg %p41
      %p48 = scmp.eq.s32.totalorder %s20, 1
      %p49 = por %p47, %p48
      %p50 = scmp.ne.s32.totalorder %s42, %s45
      %p51 = scmp.eq.s32.totalorder %s20, 0
      %p52 = por %p50, %p51
      %p53 = scmp.ne.s32.totalorder %s42, %s45
      %p54 = scmp.eq.s32.totalorder %s25, 1
      %p55 = por %p53, %p54
      %p56 = scmp.ne.s32.totalorder %s45, %s46
      %p57 = scmp.eq.s32.totalorder %s25, 0
      %p58 = por %p56, %p57
      %p59 = scmp.ne.s32.totalorder %s45, %s46
      %p60 = scmp.eq.s32.totalorder %s26, 1
      %p61 = por %p59, %p60
      %p63 = scmp.ne.s32.totalorder %s46, %s62
      %p64 = scmp.eq.s32.totalorder %s26, 0
      %p65 = por %p63, %p64
      %s66 = ssub.s32 %s27, %s39
      %p67 = scmp.eq.s32.totalorder %s66, 0
      %s69 = sadd.s32 %s68, 1
      %s70 = scalar_select %p67, %s68, %s69
      %p73 = pneg %p67
      %p74 = scmp.eq.s32.totalorder %s20, 1
      %p75 = por %p73, %p74
      %p76 = scmp.ne.s32.totalorder %s68, %s71
      %p77 = scmp.eq.s32.totalorder %s20, 0
      %p78 = por %p76, %p77
      %p79 = scmp.ne.s32.totalorder %s68, %s71
      %p80 = scmp.eq.s32.totalorder %s25, 1
      %p81 = por %p79, %p80
      %p82 = scmp.ne.s32.totalorder %s71, %s72
      %p83 = scmp.eq.s32.totalorder %s25, 0
      %p84 = por %p82, %p83
      %p85 = scmp.ne.s32.totalorder %s71, %s72
      %p86 = scmp.eq.s32.totalorder %s26, 1
      %p87 = por %p85, %p86
      %p89 = scmp.ne.s32.totalorder %s72, %s88
      %p90 = scmp.eq.s32.totalorder %s26, 0
      %p91 = por %p89, %p90
      %s92 = ssub.s32 %s27, %s39
      %s93 = ssub.s32 %s28, %s35
      %s94 = sor.u32 %s92, %s93
      %p95 = scmp.eq.s32.totalorder %s94, 0
      %s97 = sadd.s32 %s96, 1
      %s98 = scalar_select %p95, %s96, %s97
      %p101 = pneg %p95
      %p102 = scmp.eq.s32.totalorder %s20, 1
      %p103 = por %p101, %p102
      %p104 = scmp.ne.s32.totalorder %s96, %s99
      %p105 = scmp.eq.s32.totalorder %s20, 0
      %p106 = por %p104, %p105
      %p107 = scmp.ne.s32.totalorder %s96, %s99
      %p108 = scmp.eq.s32.totalorder %s25, 1
      %p109 = por %p107, %p108
      %p110 = scmp.ne.s32.totalorder %s99, %s100
      %p111 = scmp.eq.s32.totalorder %s25, 0
      %p112 = por %p110, %p111
      %p113 = scmp.ne.s32.totalorder %s99, %s100
      %p114 = scmp.eq.s32.totalorder %s26, 1
      %p115 = por %p113, %p114
      %p117 = scmp.ne.s32.totalorder %s100, %s116
      %p118 = scmp.eq.s32.totalorder %s26, 0
      %p119 = por %p117, %p118
      %s121 = sadd.s32 %s120, 1
      %p124 = scmp.eq.s32.totalorder %s20, 1
      %p125 = scmp.ne.s32.totalorder %s120, %s122
      %p126 = scmp.eq.s32.totalorder %s20, 0
      %p127 = por %p125, %p126
      %p128 = scmp.ne.s32.totalorder %s120, %s122
      %p129 = scmp.eq.s32.totalorder %s25, 1
      %p130 = por %p128, %p129
      %p131 = scmp.ne.s32.totalorder %s122, %s123
      %p132 = scmp.eq.s32.totalorder %s25, 0
      %p133 = por %p131, %p132
      %p134 = scmp.ne.s32.totalorder %s122, %s123
      %p135 = scmp.eq.s32.totalorder %s26, 1
      %p136 = por %p134, %p135
      %p138 = scmp.ne.s32.totalorder %s123, %s137
      %p139 = scmp.eq.s32.totalorder %s26, 0
      %p140 = por %p138, %p139
      %s142 = sadd.s32 %s141, 1
      %p145 = scmp.eq.s32.totalorder %s20, 1
      %p146 = scmp.ne.s32.totalorder %s141, %s143
      %p147 = scmp.eq.s32.totalorder %s20, 0
      %p148 = por %p146, %p147
      %p149 = scmp.ne.s32.totalorder %s141, %s143
      %p150 = scmp.eq.s32.totalorder %s25, 1
      %p151 = por %p149, %p150
      %p152 = scmp.ne.s32.totalorder %s143, %s144
      %p153 = scmp.eq.s32.totalorder %s25, 0
      %p154 = por %p152, %p153
      %p155 = scmp.ne.s32.totalorder %s143, %s144
      %p156 = scmp.eq.s32.totalorder %s26, 1
      %p157 = por %p155, %p156
      %p159 = scmp.ne.s32.totalorder %s144, %s158
      %p160 = scmp.eq.s32.totalorder %s26, 0
      %p161 = por %p159, %p160
      %s162 = ssub.s32 %s27, %s39
      %s163 = ssub.s32 %s28, %s35
      %s164 = sor.u32 %s162, %s163
      %p165 = scmp.eq.s32.totalorder %s164, 0
      %s167 = sadd.s32 %s166, 1
      %s168 = scalar_select %p165, %s166, %s167
      %p171 = pneg %p165
      %p172 = scmp.eq.s32.totalorder %s20, 1
      %p173 = por %p171, %p172
      %p174 = scmp.ne.s32.totalorder %s166, %s169
      %p175 = scmp.eq.s32.totalorder %s20, 0
      %p176 = por %p174, %p175
      %p177 = scmp.ne.s32.totalorder %s166, %s169
      %p178 = scmp.eq.s32.totalorder %s25, 1
      %p179 = por %p177, %p178
      %p180 = scmp.ne.s32.totalorder %s169, %s170
      %p181 = scmp.eq.s32.totalorder %s25, 0
      %p182 = por %p180, %p181
      %p183 = scmp.ne.s32.totalorder %s169, %s170
      %p184 = scmp.eq.s32.totalorder %s26, 1
      %p185 = por %p183, %p184
      %p187 = scmp.ne.s32.totalorder %s170, %s186
      %p188 = scmp.eq.s32.totalorder %s26, 0
      %p189 = por %p187, %p188
      %p190 = scmp.le.s32.totalorder 1, %s20
      %p191 = scmp.lt.s32.totalorder %s20, 3
      %p192 = pnand %p190, %p191
      %p193 = pneg %p192
      // Predicated region
      $region9: #{tpu_custom_call.1} parent=5 // pred_check
        _
      $region10: #{tpu_custom_call.1} parent=5 // pred_check_branch
        %195 = sbr.rel (%p192) target = $region12
      $region11: #{tpu_custom_call.1} parent=5 // pred_region
        %s196 = ssub.s32 %s20, 1
        // Predicated region
        $region13: #{tpu_custom_call.1} parent=11 // pred_check
          %p197 = pneg %p133
        $region14: #{tpu_custom_call.1} parent=11 // pred_check_branch
          %199 = sbr.rel (%p197) target = $region16
        $region15: #{tpu_custom_call.1} parent=11 // pred_region
          %s201 = ssub.s32 256, 256
          %202 = vsyncadd [#allocation6], %s201
          %s203 = sshll.u32 [#allocation7], 4
          %s204 = int_to_ptr.vmem [resolvable:$true] %s203
          %209 = dma.hbm_to_vmem [thread:$0]  %s3, 256, %s204, [#allocation6], 64, 64, 4
        $region16: #{tpu_custom_call.1} parent=11 // pred_fallthru
          _
        // Predicated region
        $region17: #{tpu_custom_call.1} parent=11 // pred_check
          %p210 = pneg %p154
        $region18: #{tpu_custom_call.1} parent=11 // pred_check_branch
          %212 = sbr.rel (%p210) target = $region20
        $region19: #{tpu_custom_call.1} parent=11 // pred_region
          _
        $region20: #{tpu_custom_call.1} parent=11 // pred_fallthru
          _
      $region12: #{tpu_custom_call.1} parent=5 // pred_fallthru
        _
      %p213 = scmp.lt.s32.totalorder %s20, 2
      // Predicated region
      $region21: #{tpu_custom_call.1} parent=5 // pred_check
        %p214 = pneg %p213
      $region22: #{tpu_custom_call.1} parent=5 // pred_check_branch
        %216 = sbr.rel (%p214) target = $region24
      $region23: #{tpu_custom_call.1} parent=5 // pred_region
        // Predicated region
        $region25: #{tpu_custom_call.1} parent=23 // pred_check
          %p217 = pneg %p52
        $region26: #{tpu_custom_call.1} parent=23 // pred_check_branch
          %219 = sbr.rel (%p217) target = $region28
        $region27: #{tpu_custom_call.1} parent=23 // pred_region
          %s220 = sand.u32 %s42, 1
          %s221 = scalar_lea.sflag [#allocation3], %s220
          %s222 = sand.u32 %s42, 1
          %s223 = scalar_lea.vmem [#allocation2], %s222
          %s225 = ssub.s32 16, 16
          %226 = vsyncadd %s221, %s225
          %s227 = smul.addr %s27, 16
          %s228 = scalar_lea.hbm %s0, %s227
          %s230 = sshll.u32 %s223, 4
          %s231 = int_to_ptr.vmem [resolvable:$true] %s230
          %233 = dma.hbm_to_vmem [thread:$0]  %s228, 16, %s231, %s221
        $region28: #{tpu_custom_call.1} parent=23 // pred_fallthru
          _
        // Predicated region
        $region29: #{tpu_custom_call.1} parent=23 // pred_check
          %p234 = pneg %p78
        $region30: #{tpu_custom_call.1} parent=23 // pred_check_branch
          %236 = sbr.rel (%p234) target = $region32
        $region31: #{tpu_custom_call.1} parent=23 // pred_region
          %p237 = scmp.lt.s32.totalorder %s27, 1
          %s238 = scalar_select %p237, %s27, 1
          %s239 = scalar_lea.vmem %s1, %s238
        $region32: #{tpu_custom_call.1} parent=23 // pred_fallthru
          _
        // Predicated region
        $region33: #{tpu_custom_call.1} parent=23 // pred_check
          %p240 = pneg %p106
        $region34: #{tpu_custom_call.1} parent=23 // pred_check_branch
          %242 = sbr.rel (%p240) target = $region36
        $region35: #{tpu_custom_call.1} parent=23 // pred_region
          %s243 = sand.u32 %s20, 1
          %s244 = scalar_lea.sflag [#allocation6], %s243
          %s245 = sand.u32 %s96, 1
          %s246 = smul.addr %s245, 8
          %s247 = scalar_lea.vmem [#allocation5], %s246
          %s249 = ssub.s32 128, 128
          %250 = vsyncadd %s244, %s249
          %s251 = sadd.s32 %s28, %s27
          %s252 = smul.addr %s251, 128
          %s253 = scalar_lea.hbm %s2, %s252
          %s255 = sshll.u32 %s247, 4
          %s256 = int_to_ptr.vmem [resolvable:$true] %s255
          %258 = dma.hbm_to_vmem [thread:$0]  %s253, 128, %s256, %s244
        $region36: #{tpu_custom_call.1} parent=23 // pred_fallthru
          _
      $region24: #{tpu_custom_call.1} parent=5 // pred_fallthru
        _
      %p259 = scmp.le.s32.totalorder 1, %s20
      %p260 = scmp.lt.s32.totalorder %s20, 3
      %p261 = pnand %p259, %p260
      %p262 = pneg %p261
      // Predicated region
      $region37: #{tpu_custom_call.1} parent=5 // pred_check
        _
      $region38: #{tpu_custom_call.1} parent=5 // pred_check_branch
        %264 = sbr.rel (%p261) target = $region40
      $region39: #{tpu_custom_call.1} parent=5 // pred_region
        %s265 = ssub.s32 %s20, 1
        %s266 = sand.u32 %s45, 1
        %s267 = scalar_lea.sflag [#allocation3], %s266
        %s268 = sand.u32 %s45, 1
        %s269 = scalar_lea.vmem [#allocation2], %s268
        // Predicated region
        $region41: #{tpu_custom_call.1} parent=39 // pred_check
          %p270 = pneg %p58
        $region42: #{tpu_custom_call.1} parent=39 // pred_check_branch
          %272 = sbr.rel (%p270) target = $region44
        $region43: #{tpu_custom_call.1} parent=39 // pred_region
          %273 = dma.done %s267, 16
        $region44: #{tpu_custom_call.1} parent=39 // pred_fallthru
          _
        %s274 = sand.u32 %s25, 1
        %s275 = scalar_lea.sflag [#allocation6], %s274
        %s276 = sand.u32 %s99, 1
        %s277 = smul.addr %s276, 8
        %s278 = scalar_lea.vmem [#allocation5], %s277
        // Predicated region
        $region45: #{tpu_custom_call.1} parent=39 // pred_check
          %p279 = pneg %p112
        $region46: #{tpu_custom_call.1} parent=39 // pred_check_branch
          %281 = sbr.rel (%p279) target = $region48
        $region47: #{tpu_custom_call.1} parent=39 // pred_region
          %282 = dma.done %s275, 128
        $region48: #{tpu_custom_call.1} parent=39 // pred_fallthru
          _
        // Predicated region
        $region49: #{tpu_custom_call.1} parent=39 // pred_check
          %p283 = pneg %p133
        $region50: #{tpu_custom_call.1} parent=39 // pred_check_branch
          %285 = sbr.rel (%p283) target = $region52
        $region51: #{tpu_custom_call.1} parent=39 // pred_region
          %286 = dma.done [#allocation6], 256
        $region52: #{tpu_custom_call.1} parent=39 // pred_fallthru
          _
        %s287 = sand.u32 %s45, 1
        %s288 = scalar_lea.sflag [#allocation3], %s287
        %s289 = sand.u32 %s45, 1
        %s290 = scalar_lea.vmem [#allocation2], %s289
        %p291 = pneg %p58
        %p292 = pneg %p55
        %p293 = scmp.lt.s32.totalorder %s29, 1
        %s294 = scalar_select %p293, %s29, 1
        %s295 = scalar_lea.vmem %s1, %s294
        %p296 = pneg %p84
        %p297 = pneg %p81
        %s298 = sand.u32 %s25, 1
        %s299 = scalar_lea.sflag [#allocation6], %s298
        %s300 = sand.u32 %s99, 1
        %s301 = smul.addr %s300, 8
        %s302 = scalar_lea.vmem [#allocation5], %s301
        %p303 = pneg %p112
        %p304 = pneg %p109
        %p305 = pneg %p133
        %p306 = pneg %p130
        %p307 = pneg %p154
        %p308 = pneg %p151
        %p309 = pneg %p182
        %p310 = pneg %p179
        %s311 = sand.u32 %s169, 1
        %s312 = scalar_lea.sflag [#allocation4], %s311
        %s313 = sand.u32 %s169, 1
        %s314 = smul.addr %s313, 8
        %s315 = scalar_lea.vmem [#allocation8], %s314
        %p316 = scmp.lt.s32.totalorder %s29, 1
        %s317 = scalar_select %p316, %s29, 1
        %s318 = scalar_lea.vmem %s1, %s317
        %v320 = vld [vmem:[%s278] sm:$0xff]
        %v321 = vld [vmem:[%s269] sm:$0x1]
        %v323 = vlaneseq
        %v324 = vshrl.u32 %v323, 7
        %v325 = vsub.s32 0, %v324
        %v326 = vrot.slane %v321, %v325
        %v328 = vmul.f32 %v320, %v326
        %v329 = vpack.c.bf16 %v328, %v328
        %v330 = vld [vmem:[#allocation7] sm:$0xf]
        %v331 = vld [vmem:[#allocation7 + $0x4] sm:$0xf]
        %v332 = vld [vmem:[#allocation7 + $0x8] sm:$0xf]
        %v333 = vld [vmem:[#allocation7 + $0xc] sm:$0xf]
        %v338 = vunpack.c.l.b16 %v330
        %v339 = vunpack.c.l.b16 %v331
        %v340 = vunpack.c.l.b16 %v332
        %v341 = vunpack.c.l.b16 %v333
        %v342 = vpack.c.b16 %v339, %v338
        %v343 = vpack.c.b16 %v341, %v340
        %vm346 = vcmask 261120
        %v348 = vsel %vm346, %v329, 0
        %350 = vmatprep.subr.bf16.mxu0 0
        %351 = vmatpush1.bf16.msra.mxu0 %v342
        %352 = vmatprep.subr.bf16.mxu0 0
        %353 = vmatpush1.bf16.msra.mxu0 %v343
        %354 = vmatprep.subr.bf16.mxu0 0
        %355 = vmatpush1.bf16.msra.mxu0 0
        %356 = vmatprep.subr.bf16.mxu0 0
        %357 = vmatpush1.bf16.msra.mxu0 0
        %358 = vmatprep.subr.bf16.mxu0 0
        %359 = vmatpush1.bf16.msra.mxu0 0
        %360 = vmatprep.subr.bf16.mxu0 0
        %361 = vmatpush1.bf16.msra.mxu0 0
        %362 = vmatprep.subr.bf16.mxu0 0
        %363 = vmatpush1.bf16.msra.mxu0 0
        %364 = vmatprep.subr.bf16.mxu0 0
        %365 = vmatpush1.bf16.msra.mxu0 0
        %366 = vmatprep.subr.bf16.mxu0 0
        %367 = vmatpush1.bf16.msra.mxu0 0
        %368 = vmatprep.subr.bf16.mxu0 0
        %369 = vmatpush1.bf16.msra.mxu0 0
        %370 = vmatprep.subr.bf16.mxu0 0
        %371 = vmatpush1.bf16.msra.mxu0 0
        %372 = vmatprep.subr.bf16.mxu0 0
        %373 = vmatpush1.bf16.msra.mxu0 0
        %374 = vmatprep.subr.bf16.mxu0 0
        %375 = vmatpush1.bf16.msra.mxu0 0
        %376 = vmatprep.subr.bf16.mxu0 0
        %377 = vmatpush1.bf16.msra.mxu0 0
        %378 = vmatprep.subr.bf16.mxu0 0
        %379 = vmatpush1.bf16.msra.mxu0 0
        %380 = vmatprep.subr.bf16.mxu0 0
        %381 = vmatpush1.bf16.msra.mxu0 0
        %382 = vmatprep.mubr.bf16.mxu0 0
        %383 = vmatmul.mubr.bf16.gmra.mrb[0].mxu0 %v348
        %v384 = vpop.f32.mrb[0].mxu0
        %v385 = vadd.f32 0.0, %v384
        %v386 = vpop.f32.mrb[0].mxu0
        %v387 = vpop.f32.mrb[0].mxu0
        %v388 = vpop.f32.mrb[0].mxu0
        %389 = vdwg.mxu0
        %v390 = vld [vmem:[%s4] sm:$0x1]
        %v392 = vlaneseq
        %v393 = vshrl.u32 %v392, 7
        %v394 = vsub.s32 0, %v393
        %v395 = vrot.slane %v390, %v394
        %v397 = vadd.f32 %v385, %v395
        %v398 = vld [vmem:[%s318] sm:$0x1]
        %v400 = vlaneseq
        %v401 = vshrl.u32 %v400, 7
        %v402 = vsub.s32 0, %v401
        %v403 = vrot.slane %v398, %v402
        %v405 = vmul.f32 %v397, %v403
        %406 = vst.msk [vmem:[%s315] sm:$0xff] %vm346, %v405
        %s407 = sand.u32 %s169, 1
        %s408 = scalar_lea.sflag [#allocation4], %s407
        %s409 = sand.u32 %s169, 1
        %s410 = smul.addr %s409, 8
        %s411 = scalar_lea.vmem [#allocation8], %s410
        // Predicated region
        $region53: #{tpu_custom_call.1} parent=39 // pred_check
          %p412 = pneg %p179
        $region54: #{tpu_custom_call.1} parent=39 // pred_check_branch
          %414 = sbr.rel (%p412) target = $region56
        $region55: #{tpu_custom_call.1} parent=39 // pred_region
          %s416 = ssub.s32 128, 128
          %417 = vsyncadd %s408, %s416
          %s418 = sadd.s32 %s30, %s29
          %s419 = smul.addr %s418, 128
          %s420 = scalar_lea.hbm %s5, %s419
          %s422 = sshll.u32 %s411, 4
          %s423 = int_to_ptr.vmem [resolvable:$true] %s422
          %425 = dma.vmem_to_hbm [thread:$0]  %s423, 128, %s420, %s408
        $region56: #{tpu_custom_call.1} parent=39 // pred_fallthru
          _
      $region40: #{tpu_custom_call.1} parent=5 // pred_fallthru
        _
      %p426 = scmp.le.s32.totalorder 2, %s20
      // Predicated region
      $region57: #{tpu_custom_call.1} parent=5 // pred_check
        %p427 = pneg %p426
      $region58: #{tpu_custom_call.1} parent=5 // pred_check_branch
        %429 = sbr.rel (%p427) target = $region60
      $region59: #{tpu_custom_call.1} parent=5 // pred_region
        %s430 = ssub.s32 %s20, 2
        // Predicated region
        $region61: #{tpu_custom_call.1} parent=59 // pred_check
          %p431 = pneg %p185
        $region62: #{tpu_custom_call.1} parent=59 // pred_check_branch
          %433 = sbr.rel (%p431) target = $region64
        $region63: #{tpu_custom_call.1} parent=59 // pred_region
          %s434 = sand.u32 %s170, 1
          %s435 = scalar_lea.sflag [#allocation4], %s434
          %s436 = sand.u32 %s170, 1
          %s437 = smul.addr %s436, 8
          %s438 = scalar_lea.vmem [#allocation8], %s437
          %439 = dma.done %s435, 128
        $region64: #{tpu_custom_call.1} parent=59 // pred_fallthru
          _
      $region60: #{tpu_custom_call.1} parent=5 // pred_fallthru
        _
    $region6: #{tpu_custom_call.1} parent=1 // loop_footer
      %s24 = sadd.s32 1, %s20
    $region7: #{tpu_custom_call.1} parent=1 // loop_footer_branch
      %19 = sbr.rel target = $region3
    $region8: #{tpu_custom_call.1} parent=1 // loop_exit
      _
    %440 = vsyncpa [#allocation3], 1
    %s441 = scalar_lea.sflag [#allocation3], 1
    %442 = vsyncpa %s441, 1
    %443 = vsyncpa [#allocation6], 1
    %s444 = scalar_lea.sflag [#allocation6], 1
    %445 = vsyncpa %s444, 1
    %446 = vsyncpa [#allocation4], 1
    %s447 = scalar_lea.sflag [#allocation4], 1
    %448 = vsyncpa %s447, 1

</llo_original>
